<compile_context>
chip_gen: v5e
topology: v5e:2x2
jax: 0.10.0
libtpu: 0.0.40
codegen_flags: <defaults>
</compile_context>

<pallas_src>
import jax
import jax.numpy as jnp
import numpy as np
from jax.experimental import pallas as pl
from jax.experimental.pallas import tpu as pltpu

EPS = 1e-5


def _nearest_resize_nchw(y, H, W):
    Hy, Wy = y.shape[-2], y.shape[-1]
    ri = (jnp.arange(H) * Hy) // H            # floor(i * in/out)  (PyTorch 'nearest')
    ci = (jnp.arange(W) * Wy) // W
    return y[:, :, ri, :][:, :, :, ci]


def selfspade_forward(x, y, w_gamma, w_beta, w_adapt):
    """x: (N, x_ch, H, W); y: (N, y_ch, Hy, Wy); weights in PyTorch OIHW."""
    N, _, H, W = x.shape
    CO = w_gamma.shape[0]

    # ---- layout glue in plain JAX: upsample, concat, pad, flatten, guard lanes ------
    y_up = _nearest_resize_nchw(y, H, W)
    xc = jnp.concatenate([x, y_up], axis=1)               # (N, Cin, H, W), f32
    Cin = xc.shape[1]

    Cg = ((CO + 7) // 8) * 8                               # output channels padded to 8
    Hp, Wp = H + 2, W + 2
    HpWp = Hp * Wp
    S = Wp + 1                                             # max |tap shift| in flat idx
    M = HpWp + 2 * S                                       # guarded flat length
    inv_count = 1.0 / float(N * H * W)

    xc_bf = xc.astype(jnp.bfloat16)                        # bf16 MXU operands
    xg = jnp.pad(xc_bf, ((0, 0), (0, 0), (1, 1), (1, 1))).reshape(N, Cin, HpWp)
    xg = jnp.pad(xg, ((0, 0), (0, 0), (S, S)))             # (N, Cin, M), zero guards

    # ---- weight prep: fold 0.1, fuse gamma/beta/adapt into one per-tap matrix -------
    wa2d = w_adapt[:, :, 0, 0]                                              # (CO, Cin)
    g_t = jnp.transpose(w_gamma, (2, 3, 0, 1)).reshape(9, CO, Cin) * 0.1    # (9,CO,Cin)
    b_t = jnp.transpose(w_beta, (2, 3, 0, 1)).reshape(9, CO, Cin) * 0.1
    gamma_taps = jnp.zeros((9, Cg, Cin), jnp.float32).at[:, :CO, :].set(g_t)
    beta_taps = jnp.zeros((9, Cg, Cin), jnp.float32).at[:, :CO, :].set(b_t)
    adapt_taps = jnp.zeros((9, Cg, Cin), jnp.float32).at[4, :CO, :].set(wa2d)
    wf = jnp.concatenate([gamma_taps, beta_taps, adapt_taps],
                         axis=1).astype(jnp.bfloat16)                       # (9,3Cg,Cin)
    wa_p = jnp.zeros((Cg, Cin), jnp.float32).at[:CO, :].set(wa2d).astype(jnp.bfloat16)

    # ======================= pass 1: BatchNorm batch statistics ======================
    def stats_kernel(wa_ref, x_ref, stats_ref, s_acc, q_acc):
        n = pl.program_id(0)

        @pl.when(n == 0)
        def _init():
            s_acc[...] = jnp.zeros_like(s_acc)
            q_acc[...] = jnp.zeros_like(q_acc)

        xi = x_ref[0]                                                    # (Cin, M) bf16
        # padded / guard pixels are zero -> contribute 0 to sum and sum-of-squares
        z = jnp.dot(wa_ref[...], xi, preferred_element_type=jnp.float32)  # (Cg, M) f32
        s_acc[...] += jnp.sum(z, axis=-1, keepdims=True)
        q_acc[...] += jnp.sum(z * z, axis=-1, keepdims=True)

        @pl.when(n == pl.num_programs(0) - 1)
        def _fin():
            mean = s_acc[...] * inv_count
            var = jnp.maximum(q_acc[...] * inv_count - mean * mean, 0.0)  # biased var
            inv_std = jax.lax.rsqrt(var + EPS)
            stats_ref[:, 0:1] = inv_std                 # scale
            stats_ref[:, 1:2] = -mean * inv_std         # shift

    stats = pl.pallas_call(
        stats_kernel,
        grid_spec=pltpu.PrefetchScalarGridSpec(
            num_scalar_prefetch=0,
            grid=(N,),
            in_specs=[pl.BlockSpec((Cg, Cin), lambda n: (0, 0)),       # resident weight
                      pl.BlockSpec((1, Cin, M), lambda n: (n, 0, 0))],  # per-image tile
            out_specs=pl.BlockSpec((Cg, 2), lambda n: (0, 0)),
            scratch_shapes=[pltpu.VMEM((Cg, 1), jnp.float32),
                            pltpu.VMEM((Cg, 1), jnp.float32)]),
        out_shape=jax.ShapeDtypeStruct((Cg, 2), jnp.float32),
        compiler_params=pltpu.CompilerParams(
            dimension_semantics=("arbitrary",),
            vmem_limit_bytes=32 * 1024 * 1024),
        cost_estimate=pl.CostEstimate(
            flops=int(N * (2 * Cg * Cin * M + 4 * Cg * M)),
            transcendentals=0,
            bytes_accessed=int(N * Cin * M * 2 + Cg * Cin * 2 + Cg * 2 * 4)),
    )(wa_p, xg)

    # =========== pass 2: fused 3x3 gamma/beta + 1x1 adapt conv + BN + combine ========
    def apply_kernel(wf_ref, stats_ref, x_ref, o_ref):
        xi = x_ref[0]                                   # (Cin, M) bf16
        wts = wf_ref[...]                               # (9, 3Cg, Cin) bf16
        acc = jnp.zeros((3 * Cg, HpWp), jnp.float32)
        for t in range(9):                              # static 9-tap unroll
            dy, dx = t // 3, t % 3
            a = S + (dy - 1) * Wp + (dx - 1)            # static lane shift
            xt = xi[:, a:a + HpWp]                      # shifted (Cin, HpWp) view
            acc = acc + jnp.dot(wts[t], xt, preferred_element_type=jnp.float32)
        g = acc[0:Cg, :]                                # 0.1 already folded in
        b = acc[Cg:2 * Cg, :]
        z = acc[2 * Cg:3 * Cg, :]                       # adapt output (centre tap only)
        scale = stats_ref[:, 0:1]                       # (Cg, 1)
        shift = stats_ref[:, 1:2]
        o = g * (z * scale + shift) + b                 # gamma * BN(adapt) + beta
        o_ref[0] = o[0:CO, :].astype(o_ref.dtype)

    out_pad = pl.pallas_call(
        apply_kernel,
        grid_spec=pltpu.PrefetchScalarGridSpec(
            num_scalar_prefetch=0,
            grid=(N,),
            in_specs=[pl.BlockSpec((9, 3 * Cg, Cin), lambda n: (0, 0, 0)),  # resident
                      pl.BlockSpec((Cg, 2), lambda n: (0, 0)),              # resident
                      pl.BlockSpec((1, Cin, M), lambda n: (n, 0, 0))],      # per image
            out_specs=pl.BlockSpec((1, CO, HpWp), lambda n: (n, 0, 0))),
        out_shape=jax.ShapeDtypeStruct((N, CO, HpWp), jnp.float32),
        compiler_params=pltpu.CompilerParams(
            dimension_semantics=("parallel",),
            vmem_limit_bytes=32 * 1024 * 1024),
        cost_estimate=pl.CostEstimate(
            flops=int(N * (9 * 2 * 3 * Cg * Cin * HpWp + 5 * Cg * HpWp)),
            transcendentals=0,
            bytes_accessed=int(N * Cin * M * 2 + 9 * 3 * Cg * Cin * 2
                               + Cg * 2 * 4 + N * CO * HpWp * 4)),
    )(wf, stats, xg)

    # strip the padding ring; layout is already NCHW
    out = out_pad.reshape(N, CO, Hp, Wp)[:, :, 1:H + 1, 1:W + 1]
    return out


def selfspade_reference(x, y, w_gamma, w_beta, w_adapt):
    """Pure-JAX (XLA conv, f32) reference mirroring the PyTorch module."""
    N, _, H, W = x.shape
    y_up = _nearest_resize_nchw(y, H, W)
    xc = jnp.concatenate([x, y_up], axis=1)
    dn = ('NCHW', 'OIHW', 'NCHW')
    prec = jax.lax.Precision.HIGHEST
    adapt = jax.lax.conv_general_dilated(xc, w_adapt, (1, 1), 'VALID',
                                         dimension_numbers=dn, precision=prec)
    mean = jnp.mean(adapt, axis=(0, 2, 3), keepdims=True)
    var = jnp.mean((adapt - mean) ** 2, axis=(0, 2, 3), keepdims=True)
    x_norm = (adapt - mean) / jnp.sqrt(var + EPS)
    gamma = 0.1 * jax.lax.conv_general_dilated(xc, w_gamma, (1, 1), 'SAME',
                                               dimension_numbers=dn, precision=prec)
    beta = 0.1 * jax.lax.conv_general_dilated(xc, w_beta, (1, 1), 'SAME',
                                              dimension_numbers=dn, precision=prec)
    return gamma * x_norm + beta


if __name__ == "__main__":
    x_ch, y_ch = 4, 4
    N, H, W = 2, 16, 16
    Hy, Wy = 8, 8

    key = jax.random.PRNGKey(0)
    kx, ky, kg, kb, ka = jax.random.split(key, 5)

    x = jax.random.normal(kx, (N, x_ch, H, W), dtype=jnp.float32)
    y = jax.random.normal(ky, (N, y_ch, Hy, Wy), dtype=jnp.float32)

    # Deterministic synthetic parameters (PyTorch OIHW conv weight shapes).
    w_gamma = 0.1 * jax.random.normal(kg, (x_ch, x_ch + y_ch, 3, 3), dtype=jnp.float32)
    w_beta = 0.1 * jax.random.normal(kb, (x_ch, x_ch + y_ch, 3, 3), dtype=jnp.float32)
    w_adapt = 0.1 * jax.random.normal(ka, (x_ch, x_ch + y_ch, 1, 1), dtype=jnp.float32)

    out = jax.block_until_ready(selfspade_forward(x, y, w_gamma, w_beta, w_adapt))
    ref = jax.block_until_ready(selfspade_reference(x, y, w_gamma, w_beta, w_adapt))

    assert out.shape == (N, x_ch, H, W), out.shape
    # bf16 MXU operands (f32 accumulation) -> looser tolerance than the f32 reference.
    np.testing.assert_allclose(np.asarray(out), np.asarray(ref), rtol=2e-2, atol=3e-2)
    print("KERNEL_OK")
</pallas_src>

<mosaic_0001>
module attributes {stable_mosaic.version = 11 : i64} {
  func.func @stats_kernel(%arg0: i32, %arg1: memref<8x8xbf16, #tpu.memory_space<vmem>>, %arg2: memref<1x8x362xbf16, #tpu.memory_space<vmem>>, %arg3: memref<8x2xf32, #tpu.memory_space<vmem>>, %arg4: memref<8x1xf32, #tpu.memory_space<vmem>>, %arg5: memref<8x1xf32, #tpu.memory_space<vmem>>) attributes {dimension_semantics = [#tpu.dimension_semantics<arbitrary>], iteration_bounds = array<i64: 2>, scalar_prefetch = 0 : i64, scratch_operands = 2 : i64, tpu.core_type = #tpu.core_type<tc>, window_params = [{pipeline_mode = #tpu.pipeline_mode<synchronous>, transform_indices = @transform_0, window_bounds = array<i64: 8, 8>}, {transform_indices = @transform_1, window_bounds = array<i64: 1, 8, 362>}, {pipeline_mode = #tpu.pipeline_mode<synchronous>, transform_indices = @transform_2, window_bounds = array<i64: 8, 2>}]} {
    %c0_i32 = arith.constant 0 : i32
    %0 = arith.cmpi eq, %arg0, %c0_i32 : i32
    %1 = arith.extui %0 : i1 to i32
    %c0_i32_0 = arith.constant 0 : i32
    %2 = arith.cmpi ne, %1, %c0_i32_0 : i32
    scf.if %2 {
      %cst_16 = arith.constant 0.000000e+00 : f32
      %21 = vector.broadcast %cst_16 : f32 to vector<8x1xf32>
      %c0_17 = arith.constant 0 : index
      %c0_18 = arith.constant 0 : index
      %22 = vector.load %arg4[%c0_17, %c0_18] : memref<8x1xf32, #tpu.memory_space<vmem>>, vector<8x1xf32>
      tpu.vector_store %arg4[%c0_17, %c0_18], %21 {strides = array<i32>} : memref<8x1xf32, #tpu.memory_space<vmem>>, vector<8x1xf32>,
      %cst_19 = arith.constant 0.000000e+00 : f32
      %23 = vector.broadcast %cst_19 : f32 to vector<8x1xf32>
      %c0_20 = arith.constant 0 : index
      %c0_21 = arith.constant 0 : index
      %24 = vector.load %arg5[%c0_20, %c0_21] : memref<8x1xf32, #tpu.memory_space<vmem>>, vector<8x1xf32>
      tpu.vector_store %arg5[%c0_20, %c0_21], %23 {strides = array<i32>} : memref<8x1xf32, #tpu.memory_space<vmem>>, vector<8x1xf32>,
    } else {
    }
    %c0 = arith.constant 0 : index
    %c0_1 = arith.constant 0 : index
    %c0_2 = arith.constant 0 : index
    %3 = vector.load %arg2[%c0, %c0_1, %c0_2] : memref<1x8x362xbf16, #tpu.memory_space<vmem>>, vector<1x8x362xbf16>
    %4 = vector.shape_cast %3 : vector<1x8x362xbf16> to vector<8x362xbf16>
    %c0_3 = arith.constant 0 : index
    %c0_4 = arith.constant 0 : index
    %5 = vector.load %arg1[%c0_3, %c0_4] : memref<8x8xbf16, #tpu.memory_space<vmem>>, vector<8x8xbf16>
    %cst = arith.constant dense<0.000000e+00> : vector<8x362xf32>
    %6 = tpu.matmul %5, %4, %cst {dimension_numbers = #tpu.dot_dimension_numbers<[1], [0], [0], [1], [0, 0, 1, 1], [], []>} : vector<8x8xbf16>, vector<8x362xbf16>, vector<8x362xf32> -> vector<8x362xf32>
    %c0_5 = arith.constant 0 : index
    %c0_6 = arith.constant 0 : index
    %7 = vector.load %arg4[%c0_5, %c0_6] : memref<8x1xf32, #tpu.memory_space<vmem>>, vector<8x1xf32>
    %cst_7 = arith.constant dense<0.000000e+00> : vector<8xf32>
    %8 = vector.multi_reduction <add>, %6, %cst_7 [1] : vector<8x362xf32> to vector<8xf32>
    %9 = vector.shape_cast %8 : vector<8xf32> to vector<8x1xf32>
    %10 = arith.addf %7, %9 : vector<8x1xf32>
    %c0_8 = arith.constant 0 : index
    %c0_9 = arith.constant 0 : index
    %11 = vector.load %arg4[%c0_8, %c0_9] : memref<8x1xf32, #tpu.memory_space<vmem>>, vector<8x1xf32>
    tpu.vector_store %arg4[%c0_8, %c0_9], %10 {strides = array<i32>} : memref<8x1xf32, #tpu.memory_space<vmem>>, vector<8x1xf32>,
    %c0_10 = arith.constant 0 : index
    %c0_11 = arith.constant 0 : index
    %12 = vector.load %arg5[%c0_10, %c0_11] : memref<8x1xf32, #tpu.memory_space<vmem>>, vector<8x1xf32>
    %13 = arith.mulf %6, %6 : vector<8x362xf32>
    %cst_12 = arith.constant dense<0.000000e+00> : vector<8xf32>
    %14 = vector.multi_reduction <add>, %13, %cst_12 [1] : vector<8x362xf32> to vector<8xf32>
    %15 = vector.shape_cast %14 : vector<8xf32> to vector<8x1xf32>
    %16 = arith.addf %12, %15 : vector<8x1xf32>
    %c0_13 = arith.constant 0 : index
    %c0_14 = arith.constant 0 : index
    %17 = vector.load %arg5[%c0_13, %c0_14] : memref<8x1xf32, #tpu.memory_space<vmem>>, vector<8x1xf32>
    tpu.vector_store %arg5[%c0_13, %c0_14], %16 {strides = array<i32>} : memref<8x1xf32, #tpu.memory_space<vmem>>, vector<8x1xf32>,
    %c1_i32 = arith.constant 1 : i32
    %18 = arith.cmpi eq, %arg0, %c1_i32 : i32
    %19 = arith.extui %18 : i1 to i32
    %c0_i32_15 = arith.constant 0 : i32
    %20 = arith.cmpi ne, %19, %c0_i32_15 : i32
    scf.if %20 {
      %c0_16 = arith.constant 0 : index
      %c0_17 = arith.constant 0 : index
      %21 = vector.load %arg4[%c0_16, %c0_17] : memref<8x1xf32, #tpu.memory_space<vmem>>, vector<8x1xf32>
      %cst_18 = arith.constant 0.001953125 : f32
      %22 = vector.broadcast %cst_18 : f32 to vector<8x1xf32>
      %23 = arith.mulf %21, %22 : vector<8x1xf32>
      %c0_19 = arith.constant 0 : index
      %c0_20 = arith.constant 0 : index
      %24 = vector.load %arg5[%c0_19, %c0_20] : memref<8x1xf32, #tpu.memory_space<vmem>>, vector<8x1xf32>
      %cst_21 = arith.constant 0.001953125 : f32
      %25 = vector.broadcast %cst_21 : f32 to vector<8x1xf32>
      %26 = arith.mulf %24, %25 : vector<8x1xf32>
      %27 = arith.mulf %23, %23 : vector<8x1xf32>
      %28 = arith.subf %26, %27 : vector<8x1xf32>
      %cst_22 = arith.constant 0.000000e+00 : f32
      %29 = vector.broadcast %cst_22 : f32 to vector<8x1xf32>
      %30 = arith.maximumf %28, %29 : vector<8x1xf32>
      %cst_23 = arith.constant 9.99999974E-6 : f32
      %31 = vector.broadcast %cst_23 : f32 to vector<8x1xf32>
      %32 = arith.addf %30, %31 : vector<8x1xf32>
      %33 = math.rsqrt %32 : vector<8x1xf32>
      %c0_24 = arith.constant 0 : index
      %c0_25 = arith.constant 0 : index
      %34 = vector.load %arg3[%c0_24, %c0_25] : memref<8x2xf32, #tpu.memory_space<vmem>>, vector<8x1xf32>
      tpu.vector_store %arg3[%c0_24, %c0_25], %33 {strides = array<i32>} : memref<8x2xf32, #tpu.memory_space<vmem>>, vector<8x1xf32>,
      %cst_26 = arith.constant 0.000000e+00 : f32
      %35 = vector.broadcast %cst_26 : f32 to vector<8x1xf32>
      %36 = arith.subf %35, %23 : vector<8x1xf32>
      %37 = arith.mulf %36, %33 : vector<8x1xf32>
      %c0_27 = arith.constant 0 : index
      %c1 = arith.constant 1 : index
      %38 = vector.load %arg3[%c0_27, %c1] : memref<8x2xf32, #tpu.memory_space<vmem>>, vector<8x1xf32>
      tpu.vector_store %arg3[%c0_27, %c1], %37 {strides = array<i32>} : memref<8x2xf32, #tpu.memory_space<vmem>>, vector<8x1xf32>,
    } else {
    }
    return
  }
  func.func @transform_0(%arg0: i32) -> (i32, i32) {
    %c0_i32 = arith.constant 0 : i32
    %c0_i32_0 = arith.constant 0 : i32
    %c0_i32_1 = arith.constant 0 : i32
    return %c0_i32, %c0_i32_0 : i32, i32
  }
  func.func @transform_1(%arg0: i32) -> (i32, i32, i32) {
    %c0_i32 = arith.constant 0 : i32
    %c0_i32_0 = arith.constant 0 : i32
    %c0_i32_1 = arith.constant 0 : i32
    return %arg0, %c0_i32, %c0_i32_0 : i32, i32, i32
  }
  func.func @transform_2(%arg0: i32) -> (i32, i32) {
    %c0_i32 = arith.constant 0 : i32
    %c0_i32_0 = arith.constant 0 : i32
    %c0_i32_1 = arith.constant 0 : i32
    return %c0_i32, %c0_i32_0 : i32, i32
  }
}

</mosaic_0001>

<llo_original>
// kernel: tpu_custom_call.1
$region0: #{tpu_custom_call.1}
  #allocation0 [shape = 'u32[]', space=smem, size = 0x4, offset = 0x4, fixed_abs, tag = 'smem constant byte address 0x4 - core index']
  #allocation1 [shape = 'u32[72,128]{1,0:T(1,128)}', space=vmem, size = 0x9000, scoped, tag = 'internal scratch']
  #allocation2 [shape = 'f32[8,1]{1,0:T(8,128)}', space=vmem, size = 0x1000, scoped, tag = 'scratch operand']
  #allocation3 [shape = 'f32[8,1]{1,0:T(8,128)}', space=vmem, size = 0x1000, scoped, tag = 'scratch operand']
  %s0 = inlined_call_operand.hbm [shape: bf16[8,8], index: 0, kind: input, shape index: {}]
  %s1 = inlined_call_operand.hbm [shape: bf16[2,8,362], index: 1, kind: input, shape index: {}]
  %s2 = inlined_call_operand.vmem [shape: f32[8,2], index: 2, kind: output, shape index: {}]
  %s3 = sld [smem:[#allocation0]]
  $region57: #{tpu_custom_call.1} parent=0
    _
  %s5 = ssub.s32 1, %s3
  %s6 = scalar_select 0, %s5, %s3
  $region1: #{tpu_custom_call.1} parent=0
    #allocation4 [shape = 'u8[2048]{0}', space=vmem, size = 0x800, scoped, tag = 'input window, operand 0, single buffered']
    #allocation5 [shape = 's32[2]{0}', space=sflag, size = 0x8, scoped, tag = 'scoped memory for tpu_custom_call.1']
    #allocation6 [shape = 'u8[12288]{0}', space=vmem, size = 0x3000, scoped, tag = 'input window, operand 1']
    #allocation7 [shape = 's32[2]{0}', space=sflag, size = 0x8, scoped, tag = 'scoped memory for tpu_custom_call.1']
    %7 = vsyncpa [#allocation5], 0
    %8 = vsyncpa [#allocation7], 0
    %s9 = scalar_lea.sflag [#allocation7], 1
    %10 = vsyncpa %s9, 0
    loop: start=0, step=1, limit=4
    $region2: #{tpu_custom_call.1} parent=1 // loop_pre_header
      _
    $region3: #{tpu_custom_call.1} parent=1 // loop_header
      %s12 = sphi 0, %s16
      %p13 = scmp.ge.s32.totalorder %s12, 4
      %s20 = sphi 0, %s20
      %s22 = sphi 0, %s20
      %s23 = sphi 0, %s22
      %s37 = sphi 0, %s23
      %s43 = sphi 0, %s45
      %s46 = sphi 0, %s43
      %s47 = sphi 0, %s46
      %s63 = sphi 0, %s47
      %s67 = sphi 0, %s67
      %s69 = sphi 0, %s67
      %s70 = sphi 0, %s69
      %s84 = sphi 0, %s70
    $region4: #{tpu_custom_call.1} parent=1 // loop_header_branch
      %15 = sbr.rel (%p13) target = $region8
    $region5: #{tpu_custom_call.1} parent=1 // loop_body
      %s17 = ssub.s32 %s12, 1
      %s18 = ssub.s32 %s12, 2
      %s19 = sadd.s32 %s12, 1
      %s21 = sadd.s32 %s20, 1
      %p24 = scmp.eq.s32.totalorder %s12, 1
      %p25 = scmp.ne.s32.totalorder %s20, %s22
      %p26 = scmp.eq.s32.totalorder %s12, 0
      %p27 = por %p25, %p26
      %p28 = scmp.ne.s32.totalorder %s20, %s22
      %p29 = scmp.eq.s32.totalorder %s17, 1
      %p30 = por %p28, %p29
      %p31 = scmp.ne.s32.totalorder %s22, %s23
      %p32 = scmp.eq.s32.totalorder %s17, 0
      %p33 = por %p31, %p32
      %p34 = scmp.ne.s32.totalorder %s22, %s23
      %p35 = scmp.eq.s32.totalorder %s18, 1
      %p36 = por %p34, %p35
      %p38 = scmp.ne.s32.totalorder %s23, %s37
      %p39 = scmp.eq.s32.totalorder %s18, 0
      %p40 = por %p38, %p39
      %s41 = ssub.s32 %s12, %s19
      %p42 = scmp.eq.s32.totalorder %s41, 0
      %s44 = sadd.s32 %s43, 1
      %s45 = scalar_select %p42, %s43, %s44
      %p48 = pneg %p42
      %p49 = scmp.eq.s32.totalorder %s12, 1
      %p50 = por %p48, %p49
      %p51 = scmp.ne.s32.totalorder %s43, %s46
      %p52 = scmp.eq.s32.totalorder %s12, 0
      %p53 = por %p51, %p52
      %p54 = scmp.ne.s32.totalorder %s43, %s46
      %p55 = scmp.eq.s32.totalorder %s17, 1
      %p56 = por %p54, %p55
      %p57 = scmp.ne.s32.totalorder %s46, %s47
      %p58 = scmp.eq.s32.totalorder %s17, 0
      %p59 = por %p57, %p58
      %p60 = scmp.ne.s32.totalorder %s46, %s47
      %p61 = scmp.eq.s32.totalorder %s18, 1
      %p62 = por %p60, %p61
      %p64 = scmp.ne.s32.totalorder %s47, %s63
      %p65 = scmp.eq.s32.totalorder %s18, 0
      %p66 = por %p64, %p65
      %s68 = sadd.s32 %s67, 1
      %p71 = scmp.eq.s32.totalorder %s12, 1
      %p72 = scmp.ne.s32.totalorder %s67, %s69
      %p73 = scmp.eq.s32.totalorder %s12, 0
      %p74 = por %p72, %p73
      %p75 = scmp.ne.s32.totalorder %s67, %s69
      %p76 = scmp.eq.s32.totalorder %s17, 1
      %p77 = por %p75, %p76
      %p78 = scmp.ne.s32.totalorder %s69, %s70
      %p79 = scmp.eq.s32.totalorder %s17, 0
      %p80 = por %p78, %p79
      %p81 = scmp.ne.s32.totalorder %s69, %s70
      %p82 = scmp.eq.s32.totalorder %s18, 1
      %p83 = por %p81, %p82
      %p85 = scmp.ne.s32.totalorder %s70, %s84
      %p86 = scmp.eq.s32.totalorder %s18, 0
      %p87 = por %p85, %p86
      %p88 = scmp.le.s32.totalorder 1, %s12
      %p89 = scmp.lt.s32.totalorder %s12, 3
      %p90 = pnand %p88, %p89
      %p91 = pneg %p90
      // Predicated region
      $region9: #{tpu_custom_call.1} parent=5 // pred_check
        _
      $region10: #{tpu_custom_call.1} parent=5 // pred_check_branch
        %93 = sbr.rel (%p90) target = $region12
      $region11: #{tpu_custom_call.1} parent=5 // pred_region
        %s94 = ssub.s32 %s12, 1
        // Predicated region
        $region13: #{tpu_custom_call.1} parent=11 // pred_check
          %p95 = pneg %p33
        $region14: #{tpu_custom_call.1} parent=11 // pred_check_branch
          %97 = sbr.rel (%p95) target = $region16
        $region15: #{tpu_custom_call.1} parent=11 // pred_region
          %99 = vsyncadd [#allocation5], 0
          %s101 = sshll.u32 %s0, 4
          %s102 = int_to_ptr.hbm [resolvable:$true] %s101
          %s103 = sshll.u32 [#allocation4], 4
          %s104 = int_to_ptr.vmem [resolvable:$true] %s103
          %106 = dma.hbm_to_vmem [thread:$0]  %s102, 64, %s104, [#allocation5]
        $region16: #{tpu_custom_call.1} parent=11 // pred_fallthru
          _
      $region12: #{tpu_custom_call.1} parent=5 // pred_fallthru
        _
      %p107 = scmp.lt.s32.totalorder %s12, 2
      // Predicated region
      $region17: #{tpu_custom_call.1} parent=5 // pred_check
        %p108 = pneg %p107
      $region18: #{tpu_custom_call.1} parent=5 // pred_check_branch
        %110 = sbr.rel (%p108) target = $region20
      $region19: #{tpu_custom_call.1} parent=5 // pred_region
        // Predicated region
        $region21: #{tpu_custom_call.1} parent=19 // pred_check
          %p111 = pneg %p53
        $region22: #{tpu_custom_call.1} parent=19 // pred_check_branch
          %113 = sbr.rel (%p111) target = $region24
        $region23: #{tpu_custom_call.1} parent=19 // pred_region
          %s114 = sand.u32 %s43, 1
          %s115 = scalar_lea.sflag [#allocation7], %s114
          %s116 = sand.u32 %s43, 1
          %s117 = smul.addr %s116, 12
          %s118 = scalar_lea.vmem [#allocation6], %s117
          %120 = vsyncadd %s115, 0
          %s121 = smul.addr %s12, 3
          %s122 = smul.addr %s121, 4
          %s123 = scalar_lea.hbm %s1, %s122
          %s125 = sshll.u32 %s123, 4
          %s126 = int_to_ptr.hbm [resolvable:$true] %s125
          %s127 = sshll.u32 %s118, 4
          %s128 = int_to_ptr.vmem [resolvable:$true] %s127
          %130 = dma.hbm_to_vmem [thread:$0]  %s126, 192, %s128, %s115
        $region24: #{tpu_custom_call.1} parent=19 // pred_fallthru
          _
      $region20: #{tpu_custom_call.1} parent=5 // pred_fallthru
        _
      %p131 = scmp.le.s32.totalorder 1, %s12
      %p132 = scmp.lt.s32.totalorder %s12, 3
      %p133 = pnand %p131, %p132
      %p134 = pneg %p133
      // Predicated region
      $region25: #{tpu_custom_call.1} parent=5 // pred_check
        _
      $region26: #{tpu_custom_call.1} parent=5 // pred_check_branch
        %136 = sbr.rel (%p133) target = $region28
      $region27: #{tpu_custom_call.1} parent=5 // pred_region
        %s137 = ssub.s32 %s12, 1
        // Predicated region
        $region29: #{tpu_custom_call.1} parent=27 // pred_check
          %p138 = pneg %p33
        $region30: #{tpu_custom_call.1} parent=27 // pred_check_branch
          %140 = sbr.rel (%p138) target = $region32
        $region31: #{tpu_custom_call.1} parent=27 // pred_region
          %142 = dma.done [#allocation5], 64
        $region32: #{tpu_custom_call.1} parent=27 // pred_fallthru
          _
        %s143 = sand.u32 %s46, 1
        %s144 = scalar_lea.sflag [#allocation7], %s143
        %s145 = sand.u32 %s46, 1
        %s146 = smul.addr %s145, 12
        %s147 = scalar_lea.vmem [#allocation6], %s146
        // Predicated region
        $region33: #{tpu_custom_call.1} parent=27 // pred_check
          %p148 = pneg %p59
        $region34: #{tpu_custom_call.1} parent=27 // pred_check_branch
          %150 = sbr.rel (%p148) target = $region36
        $region35: #{tpu_custom_call.1} parent=27 // pred_region
          %152 = dma.done %s144, 192
        $region36: #{tpu_custom_call.1} parent=27 // pred_fallthru
          _
        %p153 = pneg %p33
        %p154 = pneg %p30
        %s155 = sand.u32 %s46, 1
        %s156 = scalar_lea.sflag [#allocation7], %s155
        %s157 = sand.u32 %s46, 1
        %s158 = smul.addr %s157, 12
        %s159 = scalar_lea.vmem [#allocation6], %s158
        %p160 = pneg %p59
        %p161 = pneg %p56
        %p162 = pneg %p80
        %p163 = pneg %p77
        %p165 = scmp.eq.s32.totalorder %s17, 0
        // Predicated region
        $region37: #{tpu_custom_call.1} parent=27 // pred_check
          %p166 = pneg %p165
        $region38: #{tpu_custom_call.1} parent=27 // pred_check_branch
          %168 = sbr.rel (%p166) target = $region40
        $region39: #{tpu_custom_call.1} parent=27 // pred_region
          %vm169 = vcmask 7168
          %170 = vst.msk [vmem:[#allocation2] sm:$0xff] %vm169, 0.0
          %171 = vst.msk [vmem:[#allocation3] sm:$0xff] %vm169, 0.0
        $region40: #{tpu_custom_call.1} parent=27 // pred_fallthru
          _
        %v172 = vld [vmem:[%s147] sm:$0xff]
        %v173 = vld [vmem:[%s147 + $0x8] sm:$0xf]
        %v174 = vld [vmem:[#allocation4] sm:$0xf]
        %v177 = vunpack.c.l.b16 %v172
        %v178 = vunpack.c.h.b16 %v172
        %v179 = vunpack.c.l.b16 %v173
        %v180 = vpack.c.b16 %v177, %v177
        %v181 = vpack.c.b16 %v178, %v178
        %v182 = vpack.c.b16 %v179, %v179
        %vm183 = vcmask 64512
        %v185 = vsel %vm183, %v174, 0
        %vm187 = vcmask 1043456
        %v189 = vsel %vm187, %v180, 0
        %v192 = vsel %vm187, %v181, 0
        %v195 = vsel %vm187, %v182, 0
        %197 = vmatpush.bf16.msra.mxu0 0
        %198 = vmatpush.bf16.msra.mxu0 0
        %199 = vmatpush.bf16.msra.mxu0 0
        %200 = vmatpush.bf16.msra.mxu0 0
        %201 = vmatpush.bf16.msra.mxu0 0
        %202 = vmatpush.bf16.msra.mxu0 0
        %203 = vmatpush.bf16.msra.mxu0 0
        %204 = vmatpush.bf16.msra.mxu0 %v189
        %205 = vmatmul.bf16.gmra.mxu0 %v185
        %v206 = vpop.f32.mrf.mxu0
        %v207 = vadd.f32 0.0, %v206
        %v208 = vpop.f32.mrf.mxu0
        %209 = vdwg.mxu0
        %210 = vmatpush.bf16.msra.mxu0 0
        %211 = vmatpush.bf16.msra.mxu0 0
        %212 = vmatpush.bf16.msra.mxu0 0
        %213 = vmatpush.bf16.msra.mxu0 0
        %214 = vmatpush.bf16.msra.mxu0 0
        %215 = vmatpush.bf16.msra.mxu0 0
        %216 = vmatpush.bf16.msra.mxu0 0
        %217 = vmatpush.bf16.msra.mxu0 %v192
        %218 = vmatmul.bf16.gmra.mxu0 %v185
        %v219 = vpop.f32.mrf.mxu0
        %v220 = vadd.f32 0.0, %v219
        %v221 = vpop.f32.mrf.mxu0
        %222 = vdwg.mxu0
        %223 = vmatpush.bf16.msra.mxu0 0
        %224 = vmatpush.bf16.msra.mxu0 0
        %225 = vmatpush.bf16.msra.mxu0 0
        %226 = vmatpush.bf16.msra.mxu0 0
        %227 = vmatpush.bf16.msra.mxu0 0
        %228 = vmatpush.bf16.msra.mxu0 0
        %229 = vmatpush.bf16.msra.mxu0 0
        %230 = vmatpush.bf16.msra.mxu0 %v195
        %231 = vmatmul.bf16.gmra.mxu0 %v185
        %v232 = vpop.f32.mrf.mxu0
        %v233 = vadd.f32 0.0, %v232
        %v234 = vpop.f32.mrf.mxu0
        %235 = vdwg.mxu0
        %v236 = vld [vmem:[#allocation2] sm:$0xff]
        %v237 = vadd.f32 %v207, %v220
        %vm238 = vcmask 867328
        %v239 = vsel %vm238, %v233, 0.0
        %v240 = vadd.f32 %v237, %v239
        %241 = vadd.xlane.f32.xlu0 %v240
        %v242 = vpop.xlane.xlu0 %241
        %v243 = vadd.f32 %v236, %v242
        %vm244 = vcmask 7168
        %245 = vst.msk [vmem:[#allocation2] sm:$0xff] %vm244, %v243
        %v246 = vld [vmem:[#allocation3] sm:$0xff]
        %v247 = vmul.f32 %v207, %v207
        %v248 = vmul.f32 %v220, %v220
        %v249 = vmul.f32 %v233, %v233
        %v250 = vadd.f32 %v247, %v248
        %v251 = vsel %vm238, %v249, 0.0
        %v252 = vadd.f32 %v250, %v251
        %253 = vadd.xlane.f32.xlu0 %v252
        %v254 = vpop.xlane.xlu0 %253
        %v255 = vadd.f32 %v246, %v254
        %256 = vst.msk [vmem:[#allocation3] sm:$0xff] %vm244, %v255
        %p257 = scmp.eq.s32.totalorder %s17, 1
        // Predicated region
        $region41: #{tpu_custom_call.1} parent=27 // pred_check
          %p258 = pneg %p257
        $region42: #{tpu_custom_call.1} parent=27 // pred_check_branch
          %260 = sbr.rel (%p258) target = $region44
        $region43: #{tpu_custom_call.1} parent=27 // pred_region
          %v261 = vld [vmem:[#allocation2] sm:$0xff]
          %v262 = vmul.f32 %v261, 0.001953125
          %v263 = vld [vmem:[#allocation3] sm:$0xff]
          %v264 = vmul.f32 %v263, 0.001953125
          %v265 = vmul.f32 %v262, %v262
          %v266 = vsub.f32 %v264, %v265
          %v267 = vmax.f32 %v266, 0.0
          %v268 = vadd.f32 %v267, 1e-05
          %v269 = vrsqrt.pop %v268
          %v270 = vmul.f32 %v269, %v268
          %v271 = vmul.f32 %v270, %v269
          %v272 = vmul.f32 0.5, %v271
          %v273 = vsub.f32 1.5, %v272
          %v274 = vmul.f32 %v269, %v273
          %vm275 = vweird.f32 %v268
          %vm276 = vweird.f32 %v269
          %vm277 = vmor %vm275, %vm276
          %v278 = vsel %vm277, %v269, %v274
          %279 = vst.msk [vmem:[%s2] sm:$0xff] %vm244, %v278
          %v280 = vsub.f32 0.0, %v262
          %v281 = vmul.f32 %v280, %v278
          %283 = vrot.lane.b32.xlu0 %v281, 1
          %v284 = vpop.permute.xlu0 %283
          %vm286 = vcmask 15368
          %287 = vst.msk [vmem:[%s2] sm:$0xff] %vm286, %v284
        $region44: #{tpu_custom_call.1} parent=27 // pred_fallthru
          _
        // Predicated region
        $region45: #{tpu_custom_call.1} parent=27 // pred_check
          %p288 = pneg %p77
        $region46: #{tpu_custom_call.1} parent=27 // pred_check_branch
          %290 = sbr.rel (%p288) target = $region48
        $region47: #{tpu_custom_call.1} parent=27 // pred_region
          _
        $region48: #{tpu_custom_call.1} parent=27 // pred_fallthru
          _
        // Predicated region
        $region49: #{tpu_custom_call.1} parent=27 // pred_check
          %p291 = pneg %p77
        $region50: #{tpu_custom_call.1} parent=27 // pred_check_branch
          %293 = sbr.rel (%p291) target = $region52
        $region51: #{tpu_custom_call.1} parent=27 // pred_region
          _
        $region52: #{tpu_custom_call.1} parent=27 // pred_fallthru
          _
      $region28: #{tpu_custom_call.1} parent=5 // pred_fallthru
        _
      %p294 = scmp.le.s32.totalorder 2, %s12
      // Predicated region
      $region53: #{tpu_custom_call.1} parent=5 // pred_check
        %p295 = pneg %p294
      $region54: #{tpu_custom_call.1} parent=5 // pred_check_branch
        %297 = sbr.rel (%p295) target = $region56
      $region55: #{tpu_custom_call.1} parent=5 // pred_region
        %s298 = ssub.s32 %s12, 2
      $region56: #{tpu_custom_call.1} parent=5 // pred_fallthru
        _
    $region6: #{tpu_custom_call.1} parent=1 // loop_footer
      %s16 = sadd.s32 1, %s12
    $region7: #{tpu_custom_call.1} parent=1 // loop_footer_branch
      %11 = sbr.rel target = $region3
    $region8: #{tpu_custom_call.1} parent=1 // loop_exit
      _
    %299 = vsyncpa [#allocation5], 1
    %s300 = scalar_lea.sflag [#allocation5], 1
    %301 = vsyncpa %s300, 1
    %302 = vsyncpa [#allocation7], 1
    %s303 = scalar_lea.sflag [#allocation7], 1
    %304 = vsyncpa %s303, 1

</llo_original>
